<compile_context>
chip_gen: v5e
topology: v5e:2x2
jax: 0.10.0
libtpu: 0.0.40
codegen_flags: <defaults>
</compile_context>

<pallas_src>
import functools

import jax
import jax.numpy as jnp
from jax.experimental import pallas as pl
from jax.experimental.pallas import tpu as pltpu

COUNT_NORM_FACTOR = 0.2


def _count_embed_kernel(e2t_ref, params_ref, out_ref, *, n_agents):
    """One batch block, batch in the lane dimension.

    e2t_ref    : (E, T, B_blk) f32   entity -> task assignment (0/1)
    params_ref : (D, 3)        f32   columns: [0.2*w_agent, 0.2*w_other, 0.2*bias]
    out_ref    : (E, D, B_blk) f32
    """
    x = e2t_ref[...]                                               # (E, T, Bb)

    # Per-task counts: static leading-axis slices + unrolled VPU adds.
    agent_counts = jnp.sum(x[:n_agents], axis=0, keepdims=True)    # (1, T, Bb)
    other_counts = jnp.sum(x[n_agents:], axis=0, keepdims=True)    # (1, T, Bb)

    # Fold the bmm through the Linear: per-entity scalars, batch along lanes.
    A = jnp.sum(x * agent_counts, axis=1, keepdims=True)           # (E, 1, Bb)
    O = jnp.sum(x * other_counts, axis=1, keepdims=True)           # (E, 1, Bb)
    S = jnp.sum(x, axis=1, keepdims=True)                          # (E, 1, Bb)

    p = params_ref[...]                                            # (D, 3)
    w_agent = p[:, 0:1][None, :, :]                                # (1, D, 1)
    w_other = p[:, 1:2][None, :, :]                                # (1, D, 1)
    w_bias = p[:, 2:3][None, :, :]                                 # (1, D, 1)

    # (E,1,Bb)*(1,D,1) broadcasts -> (E, D, Bb); lane-dense unmasked store.
    out_ref[...] = A * w_agent + O * w_other + S * w_bias


def _round_up(x, m):
    return ((x + m - 1) // m) * m


def _choose_batch_block(B, target):
    """Lane-dense (multiple-of-128) batch blocks; >=2 grid steps when B allows
    so both v7x TensorCores get work."""
    if B <= 128:
        return B                      # single (possibly ragged) tiny block
    return max(128, min(target, _round_up(pl.cdiv(B, 2), 128)))


def count_embedder_lane_major(e2t_etb, params_scaled, n_agents, *, b_blk_target=2048):
    """Core kernel entry point (lane-dense layouts).

    e2t_etb       : (E, T, B) f32  entity->task assignment, batch in the last dim.
    params_scaled : (D, 3)    f32  [0.2*w_agent | 0.2*w_other | 0.2*bias].
    Returns (E, D, B) f32.
    """
    E, T, B = e2t_etb.shape
    D = params_scaled.shape[0]

    B_blk = _choose_batch_block(B, b_blk_target)
    num_blocks = pl.cdiv(B, B_blk)

    return pl.pallas_call(
        functools.partial(_count_embed_kernel, n_agents=int(n_agents)),
        out_shape=jax.ShapeDtypeStruct((E, D, B), jnp.float32),
        grid_spec=pltpu.PrefetchScalarGridSpec(
            num_scalar_prefetch=0,
            grid=(num_blocks,),
            in_specs=[
                pl.BlockSpec((E, T, B_blk), lambda i: (0, 0, i)),
                pl.BlockSpec((D, 3), lambda i: (0, 0)),
            ],
            out_specs=pl.BlockSpec((E, D, B_blk), lambda i: (0, 0, i)),
        ),
        compiler_params=pltpu.CompilerParams(
            dimension_semantics=("parallel",),
            vmem_limit_bytes=32 * 1024 * 1024,
        ),
    )(e2t_etb, params_scaled)


def count_embedder_forward(entity2task, weight, bias, n_agents, *, b_blk_target=2048):
    """PyTorch-shaped entry point.

    entity2task: (B, E, T) (0/1); weight: (D, 2) PyTorch Linear layout; bias: (D,).
    Returns (B, E, D) f32.
    """
    B, E, T = entity2task.shape
    D = weight.shape[0]

    # Layout plumbing (ideally done by the producer in a real model): B -> lanes.
    e2t_etb = jnp.transpose(entity2task.astype(jnp.float32), (1, 2, 0))   # (E, T, B)

    # Tiny (D, 3) operand with COUNT_NORM_FACTOR folded in (linear, so exact up
    # to one f32 rounding per weight; saves a full (E,D,B) VPU pass in-kernel).
    params_scaled = COUNT_NORM_FACTOR * jnp.concatenate(
        [weight.astype(jnp.float32), bias.astype(jnp.float32).reshape(D, 1)],
        axis=1)                                                            # (D, 3)

    out_edb = count_embedder_lane_major(
        e2t_etb, params_scaled, n_agents, b_blk_target=b_blk_target)

    # TODO(synk): consumers should take the lane-dense (E, D, B) output directly;
    # this transpose exists only to match the PyTorch (B, E, D) layout.
    return jnp.transpose(out_edb, (2, 0, 1))                              # (B, E, D)


def count_embedder_reference(entity2task, weight, bias, n_agents):
    agent_counts = entity2task[:, :n_agents].sum(axis=1)          # (B, T)
    other_counts = entity2task[:, n_agents:].sum(axis=1)          # (B, T)
    counts = jnp.stack([agent_counts, other_counts], axis=-1)     # (B, T, 2)
    pertask = (jnp.einsum('btc,dc->btd', counts, weight) + bias) * COUNT_NORM_FACTOR
    return jnp.einsum('bet,btd->bed', entity2task, pertask)


if __name__ == "__main__":
    # Small shapes consistent with the module.
    B, n_agents, n_entities, n_tasks, embed_dim = 2, 4, 8, 8, 32
    key = jax.random.PRNGKey(0)
    k1, k2, k3 = jax.random.split(key, 3)

    # Binary entity->task assignment (what the module expects).
    entity2task = (jax.random.uniform(k1, (B, n_entities, n_tasks)) > 0.5
                   ).astype(jnp.float32)

    # Deterministic Linear(2, embed_dim) parameters (PyTorch layout: (out, in)).
    weight = jax.random.normal(k2, (embed_dim, 2), dtype=jnp.float32) * 0.1
    bias = jax.random.normal(k3, (embed_dim,), dtype=jnp.float32) * 0.1

    out = count_embedder_forward(entity2task, weight, bias, n_agents)
    out = jax.block_until_ready(out)

    ref = count_embedder_reference(entity2task, weight, bias, n_agents)
    assert out.shape == (B, n_entities, embed_dim)
    assert jnp.allclose(out, ref, atol=1e-4, rtol=1e-4), "mismatch vs reference"

    print("KERNEL_OK")
</pallas_src>

<mosaic_0001>
module attributes {stable_mosaic.version = 11 : i64} {
  func.func @_count_embed_kernel(%arg0: i32, %arg1: memref<8x8x2xf32, #tpu.memory_space<vmem>>, %arg2: memref<32x3xf32, #tpu.memory_space<vmem>>, %arg3: memref<8x32x2xf32, #tpu.memory_space<vmem>>) attributes {dimension_semantics = [#tpu.dimension_semantics<parallel>], iteration_bounds = array<i64: 1>, scalar_prefetch = 0 : i64, scratch_operands = 0 : i64, tpu.core_type = #tpu.core_type<tc>, window_params = [{transform_indices = @transform_0, window_bounds = array<i64: 8, 8, 2>}, {pipeline_mode = #tpu.pipeline_mode<synchronous>, transform_indices = @transform_1, window_bounds = array<i64: 32, 3>}, {transform_indices = @transform_2, window_bounds = array<i64: 8, 32, 2>}]} {
    %c0 = arith.constant 0 : index
    %c0_0 = arith.constant 0 : index
    %c0_1 = arith.constant 0 : index
    %0 = vector.load %arg1[%c0, %c0_0, %c0_1] : memref<8x8x2xf32, #tpu.memory_space<vmem>>, vector<8x8x2xf32>
    %1 = vector.extract_strided_slice %0 {offsets = [0, 0, 0], sizes = [4, 8, 2], strides = [1, 1, 1]} : vector<8x8x2xf32> to vector<4x8x2xf32>
    %cst = arith.constant dense<0.000000e+00> : vector<8x2xf32>
    %2 = vector.multi_reduction <add>, %1, %cst [0] : vector<4x8x2xf32> to vector<8x2xf32>
    %3 = vector.shape_cast %2 : vector<8x2xf32> to vector<1x8x2xf32>
    %4 = vector.extract_strided_slice %0 {offsets = [4, 0, 0], sizes = [4, 8, 2], strides = [1, 1, 1]} : vector<8x8x2xf32> to vector<4x8x2xf32>
    %cst_2 = arith.constant dense<0.000000e+00> : vector<8x2xf32>
    %5 = vector.multi_reduction <add>, %4, %cst_2 [0] : vector<4x8x2xf32> to vector<8x2xf32>
    %6 = vector.shape_cast %5 : vector<8x2xf32> to vector<1x8x2xf32>
    %7 = vector.broadcast %3 : vector<1x8x2xf32> to vector<8x8x2xf32>
    %8 = arith.mulf %0, %7 : vector<8x8x2xf32>
    %cst_3 = arith.constant dense<0.000000e+00> : vector<8x2xf32>
    %9 = vector.multi_reduction <add>, %8, %cst_3 [1] : vector<8x8x2xf32> to vector<8x2xf32>
    %10 = vector.shape_cast %9 : vector<8x2xf32> to vector<8x1x2xf32>
    %11 = vector.broadcast %6 : vector<1x8x2xf32> to vector<8x8x2xf32>
    %12 = arith.mulf %0, %11 : vector<8x8x2xf32>
    %cst_4 = arith.constant dense<0.000000e+00> : vector<8x2xf32>
    %13 = vector.multi_reduction <add>, %12, %cst_4 [1] : vector<8x8x2xf32> to vector<8x2xf32>
    %14 = vector.shape_cast %13 : vector<8x2xf32> to vector<8x1x2xf32>
    %cst_5 = arith.constant dense<0.000000e+00> : vector<8x2xf32>
    %15 = vector.multi_reduction <add>, %0, %cst_5 [1] : vector<8x8x2xf32> to vector<8x2xf32>
    %16 = vector.shape_cast %15 : vector<8x2xf32> to vector<8x1x2xf32>
    %c0_6 = arith.constant 0 : index
    %c0_7 = arith.constant 0 : index
    %17 = vector.load %arg2[%c0_6, %c0_7] : memref<32x3xf32, #tpu.memory_space<vmem>>, vector<32x3xf32>
    %18 = vector.extract_strided_slice %17 {offsets = [0, 0], sizes = [32, 1], strides = [1, 1]} : vector<32x3xf32> to vector<32x1xf32>
    %19 = vector.shape_cast %18 : vector<32x1xf32> to vector<1x32x1xf32>
    %20 = vector.extract_strided_slice %17 {offsets = [0, 1], sizes = [32, 1], strides = [1, 1]} : vector<32x3xf32> to vector<32x1xf32>
    %21 = vector.shape_cast %20 : vector<32x1xf32> to vector<1x32x1xf32>
    %22 = vector.extract_strided_slice %17 {offsets = [0, 2], sizes = [32, 1], strides = [1, 1]} : vector<32x3xf32> to vector<32x1xf32>
    %23 = vector.shape_cast %22 : vector<32x1xf32> to vector<1x32x1xf32>
    %24 = vector.broadcast %10 : vector<8x1x2xf32> to vector<8x32x2xf32>
    %25 = vector.broadcast %19 : vector<1x32x1xf32> to vector<8x32x2xf32>
    %26 = arith.mulf %24, %25 : vector<8x32x2xf32>
    %27 = vector.broadcast %14 : vector<8x1x2xf32> to vector<8x32x2xf32>
    %28 = vector.broadcast %21 : vector<1x32x1xf32> to vector<8x32x2xf32>
    %29 = arith.mulf %27, %28 : vector<8x32x2xf32>
    %30 = arith.addf %26, %29 : vector<8x32x2xf32>
    %31 = vector.broadcast %16 : vector<8x1x2xf32> to vector<8x32x2xf32>
    %32 = vector.broadcast %23 : vector<1x32x1xf32> to vector<8x32x2xf32>
    %33 = arith.mulf %31, %32 : vector<8x32x2xf32>
    %34 = arith.addf %30, %33 : vector<8x32x2xf32>
    %c0_8 = arith.constant 0 : index
    %c0_9 = arith.constant 0 : index
    %c0_10 = arith.constant 0 : index
    %35 = vector.load %arg3[%c0_8, %c0_9, %c0_10] : memref<8x32x2xf32, #tpu.memory_space<vmem>>, vector<8x32x2xf32>
    tpu.vector_store %arg3[%c0_8, %c0_9, %c0_10], %34 {strides = array<i32>} : memref<8x32x2xf32, #tpu.memory_space<vmem>>, vector<8x32x2xf32>,
    return
  }
  func.func @transform_0(%arg0: i32) -> (i32, i32, i32) {
    %c0_i32 = arith.constant 0 : i32
    %c0_i32_0 = arith.constant 0 : i32
    %c0_i32_1 = arith.constant 0 : i32
    return %c0_i32, %c0_i32_0, %arg0 : i32, i32, i32
  }
  func.func @transform_1(%arg0: i32) -> (i32, i32) {
    %c0_i32 = arith.constant 0 : i32
    %c0_i32_0 = arith.constant 0 : i32
    %c0_i32_1 = arith.constant 0 : i32
    return %c0_i32, %c0_i32_0 : i32, i32
  }
  func.func @transform_2(%arg0: i32) -> (i32, i32, i32) {
    %c0_i32 = arith.constant 0 : i32
    %c0_i32_0 = arith.constant 0 : i32
    %c0_i32_1 = arith.constant 0 : i32
    return %c0_i32, %c0_i32_0, %arg0 : i32, i32, i32
  }
}

</mosaic_0001>

<llo_original>
// kernel: tpu_custom_call.1
$region0: #{tpu_custom_call.1}
  #allocation0 [shape = 'u32[]', space=smem, size = 0x4, offset = 0x4, fixed_abs, tag = 'smem constant byte address 0x4 - core index']
  #allocation1 [shape = 'u32[72,128]{1,0:T(1,128)}', space=vmem, size = 0x9000, scoped, tag = 'internal scratch']
  %s0 = inlined_call_operand.vmem [shape: f32[8,8,2], index: 0, kind: input, shape index: {}]
  %s1 = inlined_call_operand.vmem [shape: f32[32,3], index: 1, kind: input, shape index: {}]
  %s2 = inlined_call_operand.vmem [shape: f32[8,32,2], index: 2, kind: output, shape index: {}]
  %s3 = sld [smem:[#allocation0]]
  $region18: #{tpu_custom_call.1} parent=0
    _
  %s5 = ssub.s32 1, %s3
  %s6 = scalar_select 0, %s5, %s3
  // Predicated region
  $region2: #{tpu_custom_call.1} parent=0 // pred_check
    _
  $region3: #{tpu_custom_call.1} parent=0 // pred_check_branch
    %8 = sbr.rel (0) target = $region5
  $region4: #{tpu_custom_call.1} parent=0 // pred_region
    _
  $region5: #{tpu_custom_call.1} parent=0 // pred_fallthru
    _
  // Predicated region
  $region6: #{tpu_custom_call.1} parent=0 // pred_check
    _
  $region7: #{tpu_custom_call.1} parent=0 // pred_check_branch
    %10 = sbr.rel (0) target = $region9
  $region8: #{tpu_custom_call.1} parent=0 // pred_region
    _
  $region9: #{tpu_custom_call.1} parent=0 // pred_fallthru
    _
  %v11 = vld [vmem:[%s0] sm:$0xff]
  %v12 = vld [vmem:[%s0 + $0x8] sm:$0xff]
  %v13 = vld [vmem:[%s0 + $0x10] sm:$0xff]
  %v14 = vld [vmem:[%s0 + $0x18] sm:$0xff]
  %v15 = vld [vmem:[%s0 + $0x20] sm:$0xff]
  %v16 = vld [vmem:[%s0 + $0x28] sm:$0xff]
  %v17 = vld [vmem:[%s0 + $0x30] sm:$0xff]
  %v18 = vld [vmem:[%s0 + $0x38] sm:$0xff]
  %vm19 = vcmask 15360
  %v20 = vsel %vm19, %v11, 0.0
  %v21 = vsel %vm19, %v12, 0.0
  %v22 = vadd.f32 %v20, %v21
  %v23 = vsel %vm19, %v13, 0.0
  %v24 = vadd.f32 %v22, %v23
  %v25 = vsel %vm19, %v14, 0.0
  %v26 = vadd.f32 %v24, %v25
  %v27 = vsel %vm19, %v15, 0.0
  %v28 = vsel %vm19, %v16, 0.0
  %v29 = vadd.f32 %v27, %v28
  %v30 = vsel %vm19, %v17, 0.0
  %v31 = vadd.f32 %v29, %v30
  %v32 = vsel %vm19, %v18, 0.0
  %v33 = vadd.f32 %v31, %v32
  %v34 = vmul.f32 %v11, %v26
  %v35 = vmul.f32 %v12, %v26
  %v36 = vmul.f32 %v13, %v26
  %v37 = vmul.f32 %v14, %v26
  %v38 = vmul.f32 %v15, %v26
  %v39 = vmul.f32 %v16, %v26
  %v40 = vmul.f32 %v17, %v26
  %v41 = vmul.f32 %v18, %v26
  %v42 = vsel %vm19, %v34, 0.0
  %v43 = vrot.slane %v42, 4
  %v44 = vadd.f32 %v42, %v43
  %v45 = vrot.slane %v44, 2
  %v46 = vadd.f32 %v44, %v45
  %v47 = vrot.slane %v46, 1
  %v48 = vadd.f32 %v46, %v47
  %v49 = vsel %vm19, %v35, 0.0
  %v50 = vrot.slane %v49, 4
  %v51 = vadd.f32 %v49, %v50
  %v52 = vrot.slane %v51, 2
  %v53 = vadd.f32 %v51, %v52
  %v54 = vrot.slane %v53, 1
  %v55 = vadd.f32 %v53, %v54
  %v56 = vsel %vm19, %v36, 0.0
  %v57 = vrot.slane %v56, 4
  %v58 = vadd.f32 %v56, %v57
  %v59 = vrot.slane %v58, 2
  %v60 = vadd.f32 %v58, %v59
  %v61 = vrot.slane %v60, 1
  %v62 = vadd.f32 %v60, %v61
  %v63 = vsel %vm19, %v37, 0.0
  %v64 = vrot.slane %v63, 4
  %v65 = vadd.f32 %v63, %v64
  %v66 = vrot.slane %v65, 2
  %v67 = vadd.f32 %v65, %v66
  %v68 = vrot.slane %v67, 1
  %v69 = vadd.f32 %v67, %v68
  %v70 = vsel %vm19, %v38, 0.0
  %v71 = vrot.slane %v70, 4
  %v72 = vadd.f32 %v70, %v71
  %v73 = vrot.slane %v72, 2
  %v74 = vadd.f32 %v72, %v73
  %v75 = vrot.slane %v74, 1
  %v76 = vadd.f32 %v74, %v75
  %v77 = vsel %vm19, %v39, 0.0
  %v78 = vrot.slane %v77, 4
  %v79 = vadd.f32 %v77, %v78
  %v80 = vrot.slane %v79, 2
  %v81 = vadd.f32 %v79, %v80
  %v82 = vrot.slane %v81, 1
  %v83 = vadd.f32 %v81, %v82
  %v84 = vsel %vm19, %v40, 0.0
  %v85 = vrot.slane %v84, 4
  %v86 = vadd.f32 %v84, %v85
  %v87 = vrot.slane %v86, 2
  %v88 = vadd.f32 %v86, %v87
  %v89 = vrot.slane %v88, 1
  %v90 = vadd.f32 %v88, %v89
  %v91 = vsel %vm19, %v41, 0.0
  %v92 = vrot.slane %v91, 4
  %v93 = vadd.f32 %v91, %v92
  %v94 = vrot.slane %v93, 2
  %v95 = vadd.f32 %v93, %v94
  %v96 = vrot.slane %v95, 1
  %v97 = vadd.f32 %v95, %v96
  %v98 = vmul.f32 %v11, %v33
  %v99 = vmul.f32 %v12, %v33
  %v100 = vmul.f32 %v13, %v33
  %v101 = vmul.f32 %v14, %v33
  %v102 = vmul.f32 %v15, %v33
  %v103 = vmul.f32 %v16, %v33
  %v104 = vmul.f32 %v17, %v33
  %v105 = vmul.f32 %v18, %v33
  %v106 = vsel %vm19, %v98, 0.0
  %v107 = vrot.slane %v106, 4
  %v108 = vadd.f32 %v106, %v107
  %v109 = vrot.slane %v108, 2
  %v110 = vadd.f32 %v108, %v109
  %v111 = vrot.slane %v110, 1
  %v112 = vadd.f32 %v110, %v111
  %v113 = vsel %vm19, %v99, 0.0
  %v114 = vrot.slane %v113, 4
  %v115 = vadd.f32 %v113, %v114
  %v116 = vrot.slane %v115, 2
  %v117 = vadd.f32 %v115, %v116
  %v118 = vrot.slane %v117, 1
  %v119 = vadd.f32 %v117, %v118
  %v120 = vsel %vm19, %v100, 0.0
  %v121 = vrot.slane %v120, 4
  %v122 = vadd.f32 %v120, %v121
  %v123 = vrot.slane %v122, 2
  %v124 = vadd.f32 %v122, %v123
  %v125 = vrot.slane %v124, 1
  %v126 = vadd.f32 %v124, %v125
  %v127 = vsel %vm19, %v101, 0.0
  %v128 = vrot.slane %v127, 4
  %v129 = vadd.f32 %v127, %v128
  %v130 = vrot.slane %v129, 2
  %v131 = vadd.f32 %v129, %v130
  %v132 = vrot.slane %v131, 1
  %v133 = vadd.f32 %v131, %v132
  %v134 = vsel %vm19, %v102, 0.0
  %v135 = vrot.slane %v134, 4
  %v136 = vadd.f32 %v134, %v135
  %v137 = vrot.slane %v136, 2
  %v138 = vadd.f32 %v136, %v137
  %v139 = vrot.slane %v138, 1
  %v140 = vadd.f32 %v138, %v139
  %v141 = vsel %vm19, %v103, 0.0
  %v142 = vrot.slane %v141, 4
  %v143 = vadd.f32 %v141, %v142
  %v144 = vrot.slane %v143, 2
  %v145 = vadd.f32 %v143, %v144
  %v146 = vrot.slane %v145, 1
  %v147 = vadd.f32 %v145, %v146
  %v148 = vsel %vm19, %v104, 0.0
  %v149 = vrot.slane %v148, 4
  %v150 = vadd.f32 %v148, %v149
  %v151 = vrot.slane %v150, 2
  %v152 = vadd.f32 %v150, %v151
  %v153 = vrot.slane %v152, 1
  %v154 = vadd.f32 %v152, %v153
  %v155 = vsel %vm19, %v105, 0.0
  %v156 = vrot.slane %v155, 4
  %v157 = vadd.f32 %v155, %v156
  %v158 = vrot.slane %v157, 2
  %v159 = vadd.f32 %v157, %v158
  %v160 = vrot.slane %v159, 1
  %v161 = vadd.f32 %v159, %v160
  %v162 = vrot.slane %v20, 4
  %v163 = vadd.f32 %v20, %v162
  %v164 = vrot.slane %v163, 2
  %v165 = vadd.f32 %v163, %v164
  %v166 = vrot.slane %v165, 1
  %v167 = vadd.f32 %v165, %v166
  %v168 = vrot.slane %v21, 4
  %v169 = vadd.f32 %v21, %v168
  %v170 = vrot.slane %v169, 2
  %v171 = vadd.f32 %v169, %v170
  %v172 = vrot.slane %v171, 1
  %v173 = vadd.f32 %v171, %v172
  %v174 = vrot.slane %v23, 4
  %v175 = vadd.f32 %v23, %v174
  %v176 = vrot.slane %v175, 2
  %v177 = vadd.f32 %v175, %v176
  %v178 = vrot.slane %v177, 1
  %v179 = vadd.f32 %v177, %v178
  %v180 = vrot.slane %v25, 4
  %v181 = vadd.f32 %v25, %v180
  %v182 = vrot.slane %v181, 2
  %v183 = vadd.f32 %v181, %v182
  %v184 = vrot.slane %v183, 1
  %v185 = vadd.f32 %v183, %v184
  %v186 = vrot.slane %v27, 4
  %v187 = vadd.f32 %v27, %v186
  %v188 = vrot.slane %v187, 2
  %v189 = vadd.f32 %v187, %v188
  %v190 = vrot.slane %v189, 1
  %v191 = vadd.f32 %v189, %v190
  %v192 = vrot.slane %v28, 4
  %v193 = vadd.f32 %v28, %v192
  %v194 = vrot.slane %v193, 2
  %v195 = vadd.f32 %v193, %v194
  %v196 = vrot.slane %v195, 1
  %v197 = vadd.f32 %v195, %v196
  %v198 = vrot.slane %v30, 4
  %v199 = vadd.f32 %v30, %v198
  %v200 = vrot.slane %v199, 2
  %v201 = vadd.f32 %v199, %v200
  %v202 = vrot.slane %v201, 1
  %v203 = vadd.f32 %v201, %v202
  %v204 = vrot.slane %v32, 4
  %v205 = vadd.f32 %v32, %v204
  %v206 = vrot.slane %v205, 2
  %v207 = vadd.f32 %v205, %v206
  %v208 = vrot.slane %v207, 1
  %v209 = vadd.f32 %v207, %v208
  %v210 = vld [vmem:[%s1] sm:$0xff]
  %v211 = vld [vmem:[%s1 + $0x8] sm:$0xff]
  %v212 = vld [vmem:[%s1 + $0x10] sm:$0xff]
  %v213 = vld [vmem:[%s1 + $0x18] sm:$0xff]
  %215 = vset.pattern.permute.xlu0 0
  %216 = vperm.xlu0 %215, %v210
  %v217 = vpop.permute.xlu0 %216
  %220 = vset.pattern.permute.xlu0 0
  %221 = vperm.xlu0 %220, %v211
  %v222 = vpop.permute.xlu0 %221
  %225 = vset.pattern.permute.xlu0 0
  %226 = vperm.xlu0 %225, %v212
  %v227 = vpop.permute.xlu0 %226
  %230 = vset.pattern.permute.xlu0 0
  %231 = vperm.xlu0 %230, %v213
  %v232 = vpop.permute.xlu0 %231
  %v234 = vmul.f32 %v48, %v217
  %v235 = vmul.f32 %v48, %v222
  %v236 = vmul.f32 %v48, %v227
  %v237 = vmul.f32 %v48, %v232
  %v238 = vmul.f32 %v55, %v217
  %v239 = vmul.f32 %v55, %v222
  %v240 = vmul.f32 %v55, %v227
  %v241 = vmul.f32 %v55, %v232
  %v242 = vmul.f32 %v62, %v217
  %v243 = vmul.f32 %v62, %v222
  %v244 = vmul.f32 %v62, %v227
  %v245 = vmul.f32 %v62, %v232
  %v246 = vmul.f32 %v69, %v217
  %v247 = vmul.f32 %v69, %v222
  %v248 = vmul.f32 %v69, %v227
  %v249 = vmul.f32 %v69, %v232
  %v250 = vmul.f32 %v76, %v217
  %v251 = vmul.f32 %v76, %v222
  %v252 = vmul.f32 %v76, %v227
  %v253 = vmul.f32 %v76, %v232
  %v254 = vmul.f32 %v83, %v217
  %v255 = vmul.f32 %v83, %v222
  %v256 = vmul.f32 %v83, %v227
  %v257 = vmul.f32 %v83, %v232
  %v258 = vmul.f32 %v90, %v217
  %v259 = vmul.f32 %v90, %v222
  %v260 = vmul.f32 %v90, %v227
  %v261 = vmul.f32 %v90, %v232
  %v262 = vmul.f32 %v97, %v217
  %v263 = vmul.f32 %v97, %v222
  %v264 = vmul.f32 %v97, %v227
  %v265 = vmul.f32 %v97, %v232
  %266 = vset.pattern.permute.xlu0 1
  %267 = vperm.xlu0 %266, %v210
  %v268 = vpop.permute.xlu0 %267
  %270 = vset.pattern.permute.xlu0 1
  %271 = vperm.xlu0 %270, %v211
  %v272 = vpop.permute.xlu0 %271
  %274 = vset.pattern.permute.xlu0 1
  %275 = vperm.xlu0 %274, %v212
  %v276 = vpop.permute.xlu0 %275
  %278 = vset.pattern.permute.xlu0 1
  %279 = vperm.xlu0 %278, %v213
  %v280 = vpop.permute.xlu0 %279
  %v282 = vmul.f32 %v112, %v268
  %v283 = vmul.f32 %v112, %v272
  %v284 = vmul.f32 %v112, %v276
  %v285 = vmul.f32 %v112, %v280
  %v286 = vmul.f32 %v119, %v268
  %v287 = vmul.f32 %v119, %v272
  %v288 = vmul.f32 %v119, %v276
  %v289 = vmul.f32 %v119, %v280
  %v290 = vmul.f32 %v126, %v268
  %v291 = vmul.f32 %v126, %v272
  %v292 = vmul.f32 %v126, %v276
  %v293 = vmul.f32 %v126, %v280
  %v294 = vmul.f32 %v133, %v268
  %v295 = vmul.f32 %v133, %v272
  %v296 = vmul.f32 %v133, %v276
  %v297 = vmul.f32 %v133, %v280
  %v298 = vmul.f32 %v140, %v268
  %v299 = vmul.f32 %v140, %v272
  %v300 = vmul.f32 %v140, %v276
  %v301 = vmul.f32 %v140, %v280
  %v302 = vmul.f32 %v147, %v268
  %v303 = vmul.f32 %v147, %v272
  %v304 = vmul.f32 %v147, %v276
  %v305 = vmul.f32 %v147, %v280
  %v306 = vmul.f32 %v154, %v268
  %v307 = vmul.f32 %v154, %v272
  %v308 = vmul.f32 %v154, %v276
  %v309 = vmul.f32 %v154, %v280
  %v310 = vmul.f32 %v161, %v268
  %v311 = vmul.f32 %v161, %v272
  %v312 = vmul.f32 %v161, %v276
  %v313 = vmul.f32 %v161, %v280
  %v314 = vadd.f32 %v234, %v282
  %v315 = vadd.f32 %v235, %v283
  %v316 = vadd.f32 %v236, %v284
  %v317 = vadd.f32 %v237, %v285
  %v318 = vadd.f32 %v238, %v286
  %v319 = vadd.f32 %v239, %v287
  %v320 = vadd.f32 %v240, %v288
  %v321 = vadd.f32 %v241, %v289
  %v322 = vadd.f32 %v242, %v290
  %v323 = vadd.f32 %v243, %v291
  %v324 = vadd.f32 %v244, %v292
  %v325 = vadd.f32 %v245, %v293
  %v326 = vadd.f32 %v246, %v294
  %v327 = vadd.f32 %v247, %v295
  %v328 = vadd.f32 %v248, %v296
  %v329 = vadd.f32 %v249, %v297
  %v330 = vadd.f32 %v250, %v298
  %v331 = vadd.f32 %v251, %v299
  %v332 = vadd.f32 %v252, %v300
  %v333 = vadd.f32 %v253, %v301
  %v334 = vadd.f32 %v254, %v302
  %v335 = vadd.f32 %v255, %v303
  %v336 = vadd.f32 %v256, %v304
  %v337 = vadd.f32 %v257, %v305
  %v338 = vadd.f32 %v258, %v306
  %v339 = vadd.f32 %v259, %v307
  %v340 = vadd.f32 %v260, %v308
  %v341 = vadd.f32 %v261, %v309
  %v342 = vadd.f32 %v262, %v310
  %v343 = vadd.f32 %v263, %v311
  %v344 = vadd.f32 %v264, %v312
  %v345 = vadd.f32 %v265, %v313
  %346 = vset.pattern.permute.xlu0 2
  %347 = vperm.xlu0 %346, %v210
  %v348 = vpop.permute.xlu0 %347
  %350 = vset.pattern.permute.xlu0 2
  %351 = vperm.xlu0 %350, %v211
  %v352 = vpop.permute.xlu0 %351
  %354 = vset.pattern.permute.xlu0 2
  %355 = vperm.xlu0 %354, %v212
  %v356 = vpop.permute.xlu0 %355
  %358 = vset.pattern.permute.xlu0 2
  %359 = vperm.xlu0 %358, %v213
  %v360 = vpop.permute.xlu0 %359
  %v362 = vmul.f32 %v167, %v348
  %v363 = vmul.f32 %v167, %v352
  %v364 = vmul.f32 %v167, %v356
  %v365 = vmul.f32 %v167, %v360
  %v366 = vmul.f32 %v173, %v348
  %v367 = vmul.f32 %v173, %v352
  %v368 = vmul.f32 %v173, %v356
  %v369 = vmul.f32 %v173, %v360
  %v370 = vmul.f32 %v179, %v348
  %v371 = vmul.f32 %v179, %v352
  %v372 = vmul.f32 %v179, %v356
  %v373 = vmul.f32 %v179, %v360
  %v374 = vmul.f32 %v185, %v348
  %v375 = vmul.f32 %v185, %v352
  %v376 = vmul.f32 %v185, %v356
  %v377 = vmul.f32 %v185, %v360
  %v378 = vmul.f32 %v191, %v348
  %v379 = vmul.f32 %v191, %v352
  %v380 = vmul.f32 %v191, %v356
  %v381 = vmul.f32 %v191, %v360
  %v382 = vmul.f32 %v197, %v348
  %v383 = vmul.f32 %v197, %v352
  %v384 = vmul.f32 %v197, %v356
  %v385 = vmul.f32 %v197, %v360
  %v386 = vmul.f32 %v203, %v348
  %v387 = vmul.f32 %v203, %v352
  %v388 = vmul.f32 %v203, %v356
  %v389 = vmul.f32 %v203, %v360
  %v390 = vmul.f32 %v209, %v348
  %v391 = vmul.f32 %v209, %v352
  %v392 = vmul.f32 %v209, %v356
  %v393 = vmul.f32 %v209, %v360
  %v394 = vadd.f32 %v314, %v362
  %v395 = vadd.f32 %v315, %v363
  %v396 = vadd.f32 %v316, %v364
  %v397 = vadd.f32 %v317, %v365
  %v398 = vadd.f32 %v318, %v366
  %v399 = vadd.f32 %v319, %v367
  %v400 = vadd.f32 %v320, %v368
  %v401 = vadd.f32 %v321, %v369
  %v402 = vadd.f32 %v322, %v370
  %v403 = vadd.f32 %v323, %v371
  %v404 = vadd.f32 %v324, %v372
  %v405 = vadd.f32 %v325, %v373
  %v406 = vadd.f32 %v326, %v374
  %v407 = vadd.f32 %v327, %v375
  %v408 = vadd.f32 %v328, %v376
  %v409 = vadd.f32 %v329, %v377
  %v410 = vadd.f32 %v330, %v378
  %v411 = vadd.f32 %v331, %v379
  %v412 = vadd.f32 %v332, %v380
  %v413 = vadd.f32 %v333, %v381
  %v414 = vadd.f32 %v334, %v382
  %v415 = vadd.f32 %v335, %v383
  %v416 = vadd.f32 %v336, %v384
  %v417 = vadd.f32 %v337, %v385
  %v418 = vadd.f32 %v338, %v386
  %v419 = vadd.f32 %v339, %v387
  %v420 = vadd.f32 %v340, %v388
  %v421 = vadd.f32 %v341, %v389
  %v422 = vadd.f32 %v342, %v390
  %v423 = vadd.f32 %v343, %v391
  %v424 = vadd.f32 %v344, %v392
  %v425 = vadd.f32 %v345, %v393
  %426 = vst.msk [vmem:[%s2] sm:$0xff] %vm19, %v394
  %427 = vst.msk [vmem:[%s2 + $0x8] sm:$0xff] %vm19, %v395
  %428 = vst.msk [vmem:[%s2 + $0x10] sm:$0xff] %vm19, %v396
  %429 = vst.msk [vmem:[%s2 + $0x18] sm:$0xff] %vm19, %v397
  %430 = vst.msk [vmem:[%s2 + $0x20] sm:$0xff] %vm19, %v398
  %431 = vst.msk [vmem:[%s2 + $0x28] sm:$0xff] %vm19, %v399
  %432 = vst.msk [vmem:[%s2 + $0x30] sm:$0xff] %vm19, %v400
  %433 = vst.msk [vmem:[%s2 + $0x38] sm:$0xff] %vm19, %v401
  %434 = vst.msk [vmem:[%s2 + $0x40] sm:$0xff] %vm19, %v402
  %435 = vst.msk [vmem:[%s2 + $0x48] sm:$0xff] %vm19, %v403
  %436 = vst.msk [vmem:[%s2 + $0x50] sm:$0xff] %vm19, %v404
  %437 = vst.msk [vmem:[%s2 + $0x58] sm:$0xff] %vm19, %v405
  %438 = vst.msk [vmem:[%s2 + $0x60] sm:$0xff] %vm19, %v406
  %439 = vst.msk [vmem:[%s2 + $0x68] sm:$0xff] %vm19, %v407
  %440 = vst.msk [vmem:[%s2 + $0x70] sm:$0xff] %vm19, %v408
  %441 = vst.msk [vmem:[%s2 + $0x78] sm:$0xff] %vm19, %v409
  %442 = vst.msk [vmem:[%s2 + $0x80] sm:$0xff] %vm19, %v410
  %443 = vst.msk [vmem:[%s2 + $0x88] sm:$0xff] %vm19, %v411
  %444 = vst.msk [vmem:[%s2 + $0x90] sm:$0xff] %vm19, %v412
  %445 = vst.msk [vmem:[%s2 + $0x98] sm:$0xff] %vm19, %v413
  %446 = vst.msk [vmem:[%s2 + $0xa0] sm:$0xff] %vm19, %v414
  %447 = vst.msk [vmem:[%s2 + $0xa8] sm:$0xff] %vm19, %v415
  %448 = vst.msk [vmem:[%s2 + $0xb0] sm:$0xff] %vm19, %v416
  %449 = vst.msk [vmem:[%s2 + $0xb8] sm:$0xff] %vm19, %v417
  %450 = vst.msk [vmem:[%s2 + $0xc0] sm:$0xff] %vm19, %v418
  %451 = vst.msk [vmem:[%s2 + $0xc8] sm:$0xff] %vm19, %v419
  %452 = vst.msk [vmem:[%s2 + $0xd0] sm:$0xff] %vm19, %v420
  %453 = vst.msk [vmem:[%s2 + $0xd8] sm:$0xff] %vm19, %v421
  %454 = vst.msk [vmem:[%s2 + $0xe0] sm:$0xff] %vm19, %v422
  %455 = vst.msk [vmem:[%s2 + $0xe8] sm:$0xff] %vm19, %v423
  %456 = vst.msk [vmem:[%s2 + $0xf0] sm:$0xff] %vm19, %v424
  %457 = vst.msk [vmem:[%s2 + $0xf8] sm:$0xff] %vm19, %v425
  // Predicated region
  $region10: #{tpu_custom_call.1} parent=0 // pred_check
    _
  $region11: #{tpu_custom_call.1} parent=0 // pred_check_branch
    %459 = sbr.rel (0) target = $region13
  $region12: #{tpu_custom_call.1} parent=0 // pred_region
    _
  $region13: #{tpu_custom_call.1} parent=0 // pred_fallthru
    _
  // Predicated region
  $region14: #{tpu_custom_call.1} parent=0 // pred_check
    _
  $region15: #{tpu_custom_call.1} parent=0 // pred_check_branch
    %461 = sbr.rel (0) target = $region17
  $region16: #{tpu_custom_call.1} parent=0 // pred_region
    _
  $region17: #{tpu_custom_call.1} parent=0 // pred_fallthru
    _

</llo_original>
